<compile_context>
chip_gen: v7x
topology: tpu7x:2x2x1
jax: 0.10.0
libtpu: 0.0.40
codegen_flags: <defaults>
</compile_context>

<pallas_src>
import jax
import jax.numpy as jnp
from jax.experimental import pallas as pl
from jax.experimental.pallas import tpu as pltpu

_LANE = 128
_SUBLANE = 8
_NEG_BIG = -1e30  # bias for padded class lanes: exp() underflows to 0 in softmax


def _round_up(x, m):
    return (x + m - 1) // m * m


def classifier_kernel(x_ref, w1_ref, b1_ref, wc_ref, bc_ref,
                      hidden_ref, logits_ref):
    # ---- layer1 + ReLU (K and N both 128-wide -> unmasked MXU tiles) ----
    x = x_ref[...]
    h = jnp.dot(x, w1_ref[...], preferred_element_type=jnp.float32) + b1_ref[...]
    h = jnp.maximum(h, 0.0)
    hidden_ref[...] = h                       # lane-dense [tb, 128] store

    # ---- cls head (padded to 128 output lanes; pad lanes biased to -1e30) ----
    out = jnp.dot(h, wc_ref[...], preferred_element_type=jnp.float32) + bc_ref[...]

    # ---- log_softmax over the class (lane) axis; pad lanes contribute 0 ----
    m = jnp.max(out, axis=1, keepdims=True)
    z = out - m
    lse = jnp.log(jnp.sum(jnp.exp(z), axis=1, keepdims=True))
    logits_ref[...] = z - lse                 # lane-dense [tb, 128] store


def classifier_forward(x, w1, b1, wc, bc, *, block_b=512):
    B, in_dim = x.shape
    hid_dim = w1.shape[1]
    n_cls = wc.shape[1]

    in_pad = _round_up(in_dim, _LANE)
    hid_pad = _round_up(hid_dim, _LANE)
    cls_pad = _round_up(n_cls, _LANE)

    tb = min(block_b, _round_up(B, _SUBLANE))   # batch tile (rows)
    b_pad = _round_up(B, tb)

    # Host-side zero padding -> every kernel operand / output is lane-dense.
    x_p = jnp.zeros((b_pad, in_pad), jnp.float32).at[:B, :in_dim].set(x)
    w1_p = jnp.zeros((in_pad, hid_pad), jnp.float32).at[:in_dim, :hid_dim].set(w1)
    b1_p = jnp.zeros((1, hid_pad), jnp.float32).at[:, :hid_dim].set(b1)
    wc_p = jnp.zeros((hid_pad, cls_pad), jnp.float32).at[:hid_dim, :n_cls].set(wc)
    bc_p = jnp.full((1, cls_pad), _NEG_BIG, jnp.float32).at[:, :n_cls].set(bc)

    flops = 2 * b_pad * (in_pad * hid_pad + hid_pad * cls_pad)
    bytes_accessed = 4 * (x_p.size + w1_p.size + b1_p.size + wc_p.size + bc_p.size
                          + b_pad * hid_pad + b_pad * cls_pad)
    cost = pl.CostEstimate(flops=flops,
                           transcendentals=b_pad * cls_pad,
                           bytes_accessed=bytes_accessed)

    hidden_p, logits_p = pl.pallas_call(
        classifier_kernel,
        out_shape=(
            jax.ShapeDtypeStruct((b_pad, hid_pad), jnp.float32),
            jax.ShapeDtypeStruct((b_pad, cls_pad), jnp.float32),
        ),
        grid_spec=pltpu.PrefetchScalarGridSpec(
            num_scalar_prefetch=0,
            grid=(b_pad // tb,),
            in_specs=[
                pl.BlockSpec((tb, in_pad), lambda i: (i, 0)),
                pl.BlockSpec((in_pad, hid_pad), lambda i: (0, 0)),   # weights stay resident
                pl.BlockSpec((1, hid_pad), lambda i: (0, 0)),
                pl.BlockSpec((hid_pad, cls_pad), lambda i: (0, 0)),
                pl.BlockSpec((1, cls_pad), lambda i: (0, 0)),
            ],
            out_specs=(
                pl.BlockSpec((tb, hid_pad), lambda i: (i, 0)),
                pl.BlockSpec((tb, cls_pad), lambda i: (i, 0)),
            ),
        ),
        compiler_params=pltpu.CompilerParams(
            dimension_semantics=("parallel",),     # megacore / 2-TC sharding on v7x
            vmem_limit_bytes=32 * 1024 * 1024,     # safe on v5e/v6e/v7x
        ),
        cost_estimate=cost,
    )(x_p, w1_p, b1_p, wc_p, bc_p)

    # Strip padding outside the kernel; forward semantics return (hidden, logits).
    return hidden_p[:B, :hid_dim], logits_p[:B, :n_cls]


def _linear_init(key, fan_in, fan_out):
    # Mirror PyTorch nn.Linear default init: U(-1/sqrt(fan_in), 1/sqrt(fan_in)).
    kw, kb = jax.random.split(key)
    bound = 1.0 / (fan_in ** 0.5)
    # Stored as [in, out] (transpose of PyTorch's [out, in]).
    w = jax.random.uniform(kw, (fan_in, fan_out), jnp.float32, -bound, bound)
    b = jax.random.uniform(kb, (1, fan_out), jnp.float32, -bound, bound)
    return w, b


if __name__ == "__main__":
    in_dim, hid_dim, n_cls = 114, 60, 2
    B = 8

    key = jax.random.PRNGKey(0)
    kx, k1, k2, kc = jax.random.split(key, 4)

    x = jax.random.normal(kx, (B, in_dim), jnp.float32)

    # layer1 and cls are used in forward; layer2 exists in __init__ but is
    # never applied in forward, so we only initialize it for shape parity.
    w1, b1 = _linear_init(k1, in_dim, hid_dim)
    w2, b2 = _linear_init(k2, hid_dim, hid_dim)  # unused in forward (matches PyTorch)
    wc, bc = _linear_init(kc, hid_dim, n_cls)

    hidden, logits = classifier_forward(x, w1, b1, wc, bc)
    jax.block_until_ready((hidden, logits))

    # Pure-JAX reference check.
    h_ref = jnp.maximum(x @ w1 + b1, 0.0)
    out_ref = h_ref @ wc + bc
    logits_ref = jax.nn.log_softmax(out_ref, axis=1)
    assert hidden.shape == (B, hid_dim) and logits.shape == (B, n_cls)
    assert jnp.allclose(hidden, h_ref, atol=1e-5, rtol=1e-5)
    assert jnp.allclose(logits, logits_ref, atol=1e-5, rtol=1e-5)

    print("KERNEL_OK")
</pallas_src>

<mosaic_0001>
module attributes {stable_mosaic.version = 11 : i64} {
  func.func @classifier_kernel(%arg0: i32, %arg1: memref<8x128xf32, #tpu.memory_space<vmem>>, %arg2: memref<128x128xf32, #tpu.memory_space<vmem>>, %arg3: memref<1x128xf32, #tpu.memory_space<vmem>>, %arg4: memref<128x128xf32, #tpu.memory_space<vmem>>, %arg5: memref<1x128xf32, #tpu.memory_space<vmem>>, %arg6: memref<8x128xf32, #tpu.memory_space<vmem>>, %arg7: memref<8x128xf32, #tpu.memory_space<vmem>>) attributes {dimension_semantics = [#tpu.dimension_semantics<parallel>], iteration_bounds = array<i64: 1>, scalar_prefetch = 0 : i64, scratch_operands = 0 : i64, tpu.core_type = #tpu.core_type<tc>, window_params = [{transform_indices = @transform_0, window_bounds = array<i64: 8, 128>}, {pipeline_mode = #tpu.pipeline_mode<synchronous>, transform_indices = @transform_1, window_bounds = array<i64: 128, 128>}, {pipeline_mode = #tpu.pipeline_mode<synchronous>, transform_indices = @transform_2, window_bounds = array<i64: 1, 128>}, {pipeline_mode = #tpu.pipeline_mode<synchronous>, transform_indices = @transform_3, window_bounds = array<i64: 128, 128>}, {pipeline_mode = #tpu.pipeline_mode<synchronous>, transform_indices = @transform_4, window_bounds = array<i64: 1, 128>}, {transform_indices = @transform_5, window_bounds = array<i64: 8, 128>}, {transform_indices = @transform_6, window_bounds = array<i64: 8, 128>}]} {
    %c0 = arith.constant 0 : index
    %c0_0 = arith.constant 0 : index
    %0 = vector.load %arg1[%c0, %c0_0] : memref<8x128xf32, #tpu.memory_space<vmem>>, vector<8x128xf32>
    %c0_1 = arith.constant 0 : index
    %c0_2 = arith.constant 0 : index
    %1 = vector.load %arg2[%c0_1, %c0_2] : memref<128x128xf32, #tpu.memory_space<vmem>>, vector<128x128xf32>
    %cst = arith.constant dense<0.000000e+00> : vector<8x128xf32>
    %2 = tpu.matmul %0, %1, %cst {dimension_numbers = #tpu.dot_dimension_numbers<[1], [0], [0], [1], [0, 0, 1, 1], [], []>} : vector<8x128xf32>, vector<128x128xf32>, vector<8x128xf32> -> vector<8x128xf32>
    %c0_3 = arith.constant 0 : index
    %c0_4 = arith.constant 0 : index
    %3 = vector.load %arg3[%c0_3, %c0_4] : memref<1x128xf32, #tpu.memory_space<vmem>>, vector<1x128xf32>
    %4 = vector.broadcast %3 : vector<1x128xf32> to vector<8x128xf32>
    %5 = arith.addf %2, %4 : vector<8x128xf32>
    %cst_5 = arith.constant 0.000000e+00 : f32
    %6 = vector.broadcast %cst_5 : f32 to vector<8x128xf32>
    %7 = arith.maximumf %5, %6 : vector<8x128xf32>
    %c0_6 = arith.constant 0 : index
    %c0_7 = arith.constant 0 : index
    %8 = vector.load %arg6[%c0_6, %c0_7] : memref<8x128xf32, #tpu.memory_space<vmem>>, vector<8x128xf32>
    tpu.vector_store %arg6[%c0_6, %c0_7], %7 {strides = array<i32>} : memref<8x128xf32, #tpu.memory_space<vmem>>, vector<8x128xf32>,
    %c0_8 = arith.constant 0 : index
    %c0_9 = arith.constant 0 : index
    %9 = vector.load %arg4[%c0_8, %c0_9] : memref<128x128xf32, #tpu.memory_space<vmem>>, vector<128x128xf32>
    %cst_10 = arith.constant dense<0.000000e+00> : vector<8x128xf32>
    %10 = tpu.matmul %7, %9, %cst_10 {dimension_numbers = #tpu.dot_dimension_numbers<[1], [0], [0], [1], [0, 0, 1, 1], [], []>} : vector<8x128xf32>, vector<128x128xf32>, vector<8x128xf32> -> vector<8x128xf32>
    %c0_11 = arith.constant 0 : index
    %c0_12 = arith.constant 0 : index
    %11 = vector.load %arg5[%c0_11, %c0_12] : memref<1x128xf32, #tpu.memory_space<vmem>>, vector<1x128xf32>
    %12 = vector.broadcast %11 : vector<1x128xf32> to vector<8x128xf32>
    %13 = arith.addf %10, %12 : vector<8x128xf32>
    %cst_13 = arith.constant dense<0xFF800000> : vector<8xf32>
    %14 = vector.multi_reduction <maximumf>, %13, %cst_13 [1] : vector<8x128xf32> to vector<8xf32>
    %15 = vector.shape_cast %14 : vector<8xf32> to vector<8x1xf32>
    %16 = vector.broadcast %15 : vector<8x1xf32> to vector<8x128xf32>
    %17 = arith.subf %13, %16 : vector<8x128xf32>
    %18 = math.exp %17 : vector<8x128xf32>
    %cst_14 = arith.constant dense<0.000000e+00> : vector<8xf32>
    %19 = vector.multi_reduction <add>, %18, %cst_14 [1] : vector<8x128xf32> to vector<8xf32>
    %20 = vector.shape_cast %19 : vector<8xf32> to vector<8x1xf32>
    %21 = math.log %20 : vector<8x1xf32>
    %22 = vector.broadcast %21 : vector<8x1xf32> to vector<8x128xf32>
    %23 = arith.subf %17, %22 : vector<8x128xf32>
    %c0_15 = arith.constant 0 : index
    %c0_16 = arith.constant 0 : index
    %24 = vector.load %arg7[%c0_15, %c0_16] : memref<8x128xf32, #tpu.memory_space<vmem>>, vector<8x128xf32>
    tpu.vector_store %arg7[%c0_15, %c0_16], %23 {strides = array<i32>} : memref<8x128xf32, #tpu.memory_space<vmem>>, vector<8x128xf32>,
    return
  }
  func.func @transform_0(%arg0: i32) -> (i32, i32) {
    %c0_i32 = arith.constant 0 : i32
    %c0_i32_0 = arith.constant 0 : i32
    return %arg0, %c0_i32 : i32, i32
  }
  func.func @transform_1(%arg0: i32) -> (i32, i32) {
    %c0_i32 = arith.constant 0 : i32
    %c0_i32_0 = arith.constant 0 : i32
    %c0_i32_1 = arith.constant 0 : i32
    return %c0_i32, %c0_i32_0 : i32, i32
  }
  func.func @transform_2(%arg0: i32) -> (i32, i32) {
    %c0_i32 = arith.constant 0 : i32
    %c0_i32_0 = arith.constant 0 : i32
    %c0_i32_1 = arith.constant 0 : i32
    return %c0_i32, %c0_i32_0 : i32, i32
  }
  func.func @transform_3(%arg0: i32) -> (i32, i32) {
    %c0_i32 = arith.constant 0 : i32
    %c0_i32_0 = arith.constant 0 : i32
    %c0_i32_1 = arith.constant 0 : i32
    return %c0_i32, %c0_i32_0 : i32, i32
  }
  func.func @transform_4(%arg0: i32) -> (i32, i32) {
    %c0_i32 = arith.constant 0 : i32
    %c0_i32_0 = arith.constant 0 : i32
    %c0_i32_1 = arith.constant 0 : i32
    return %c0_i32, %c0_i32_0 : i32, i32
  }
  func.func @transform_5(%arg0: i32) -> (i32, i32) {
    %c0_i32 = arith.constant 0 : i32
    %c0_i32_0 = arith.constant 0 : i32
    return %arg0, %c0_i32 : i32, i32
  }
  func.func @transform_6(%arg0: i32) -> (i32, i32) {
    %c0_i32 = arith.constant 0 : i32
    %c0_i32_0 = arith.constant 0 : i32
    return %arg0, %c0_i32 : i32, i32
  }
}

</mosaic_0001>

<llo_original>
// kernel: tpu_custom_call.1
$region0: #{tpu_custom_call.1}
  #allocation0 [shape = 'u32[]', space=smem, size = 0x4, offset = 0x4, fixed_abs, tag = 'smem constant byte address 0x4 - core index']
  #allocation1 [shape = 'u32[144,128]{1,0:T(1,128)}', space=vmem, size = 0x12000, scoped, tag = 'internal scratch']
  %s0 = inlined_call_operand.hbm [shape: f32[8,128], index: 0, kind: input, shape index: {}]
  %s1 = inlined_call_operand.hbm [shape: f32[128,128], index: 1, kind: input, shape index: {}]
  %s2 = inlined_call_operand.vmem [shape: f32[1,128], index: 2, kind: input, shape index: {}]
  %s3 = inlined_call_operand.hbm [shape: f32[128,128], index: 3, kind: input, shape index: {}]
  %s4 = inlined_call_operand.vmem [shape: f32[1,128], index: 4, kind: input, shape index: {}]
  %s5 = inlined_call_operand.hbm [shape: f32[8,128], index: 5, kind: output, shape index: {0}]
  %s6 = inlined_call_operand.hbm [shape: f32[8,128], index: 6, kind: output, shape index: {1}]
  %7 = xla_tuple %s5, %s6
  %s8 = sld [smem:[#allocation0]]
  $region50: #{tpu_custom_call.1} parent=0
    _
  %s10 = ssub.s32 1, %s8
  %s11 = scalar_select 0, %s10, %s8
  $region1: #{tpu_custom_call.1} parent=0
    #allocation2 [shape = 'u8[4096]{0}', space=vmem, size = 0x1000, scoped, tag = 'input window, operand 0, single buffered']
    #allocation3 [shape = 's32[1]{0}', space=sflag, size = 0x4, scoped, tag = 'scoped memory for tpu_custom_call.1']
    #allocation4 [shape = 's32[1]{0}', space=sflag, size = 0x4, scoped, tag = 'scoped memory for tpu_custom_call.1']
    #allocation5 [shape = 'u8[65536]{0}', space=vmem, size = 0x10000, scoped, tag = 'input window, operand 1, single buffered']
    #allocation6 [shape = 's32[1]{0}', space=sflag, size = 0x4, scoped, tag = 'scoped memory for tpu_custom_call.1']
    #allocation7 [shape = 'u8[65536]{0}', space=vmem, size = 0x10000, scoped, tag = 'input window, operand 3, single buffered']
    #allocation8 [shape = 'u8[4096]{0}', space=vmem, size = 0x1000, scoped, tag = 'output window, operand 0, single buffered']
    #allocation9 [shape = 'u8[4096]{0}', space=vmem, size = 0x1000, scoped, tag = 'output window, operand 1, single buffered']
    #allocation10 [shape = 's32[1]{0}', space=sflag, size = 0x4, scoped, tag = 'scoped memory for tpu_custom_call.1']
    %12 = vsyncpa [#allocation3], 0
    %13 = vsyncpa [#allocation6], 0
    %14 = vsyncpa [#allocation4], 0
    %15 = vsyncpa [#allocation10], 0
    // Predicated region
    $region2: #{tpu_custom_call.1} parent=1 // pred_check
      _
    $region3: #{tpu_custom_call.1} parent=1 // pred_check_branch
      %17 = sbr.rel (0) target = $region5
    $region4: #{tpu_custom_call.1} parent=1 // pred_region
      %s19 = ssub.s32 128, 128
      %20 = vsyncadd [#allocation3], %s19
      %s22 = sshll.u32 [#allocation2], 4
      %s23 = int_to_ptr.vmem [resolvable:$true] %s22
      %25 = dma.hbm_to_vmem [thread:$0]  %s0, 128, %s23, [#allocation3]
    $region5: #{tpu_custom_call.1} parent=1 // pred_fallthru
      _
    // Predicated region
    $region6: #{tpu_custom_call.1} parent=1 // pred_check
      _
    $region7: #{tpu_custom_call.1} parent=1 // pred_check_branch
      %27 = sbr.rel (0) target = $region9
    $region8: #{tpu_custom_call.1} parent=1 // pred_region
      %s29 = ssub.s32 2048, 2048
      %30 = vsyncadd [#allocation6], %s29
      %s31 = sshll.u32 [#allocation5], 4
      %s32 = int_to_ptr.vmem [resolvable:$true] %s31
      %37 = dma.hbm_to_vmem [thread:$0]  %s1, 2048, %s32, [#allocation6], 128, 128, 8
    $region9: #{tpu_custom_call.1} parent=1 // pred_fallthru
      _
    // Predicated region
    $region10: #{tpu_custom_call.1} parent=1 // pred_check
      _
    $region11: #{tpu_custom_call.1} parent=1 // pred_check_branch
      %39 = sbr.rel (0) target = $region13
    $region12: #{tpu_custom_call.1} parent=1 // pred_region
      _
    $region13: #{tpu_custom_call.1} parent=1 // pred_fallthru
      _
    // Predicated region
    $region14: #{tpu_custom_call.1} parent=1 // pred_check
      _
    $region15: #{tpu_custom_call.1} parent=1 // pred_check_branch
      %41 = sbr.rel (0) target = $region17
    $region16: #{tpu_custom_call.1} parent=1 // pred_region
      %s43 = ssub.s32 2048, 2048
      %44 = vsyncadd [#allocation6], %s43
      %s45 = sshll.u32 [#allocation7], 4
      %s46 = int_to_ptr.vmem [resolvable:$true] %s45
      %51 = dma.hbm_to_vmem [thread:$0]  %s3, 2048, %s46, [#allocation6], 128, 128, 8
    $region17: #{tpu_custom_call.1} parent=1 // pred_fallthru
      _
    // Predicated region
    $region18: #{tpu_custom_call.1} parent=1 // pred_check
      _
    $region19: #{tpu_custom_call.1} parent=1 // pred_check_branch
      %53 = sbr.rel (0) target = $region21
    $region20: #{tpu_custom_call.1} parent=1 // pred_region
      _
    $region21: #{tpu_custom_call.1} parent=1 // pred_fallthru
      _
    // Predicated region
    $region22: #{tpu_custom_call.1} parent=1 // pred_check
      _
    $region23: #{tpu_custom_call.1} parent=1 // pred_check_branch
      %55 = sbr.rel (0) target = $region25
    $region24: #{tpu_custom_call.1} parent=1 // pred_region
      %56 = dma.done [#allocation3], 128
    $region25: #{tpu_custom_call.1} parent=1 // pred_fallthru
      _
    // Predicated region
    $region26: #{tpu_custom_call.1} parent=1 // pred_check
      _
    $region27: #{tpu_custom_call.1} parent=1 // pred_check_branch
      %58 = sbr.rel (0) target = $region29
    $region28: #{tpu_custom_call.1} parent=1 // pred_region
      %59 = dma.done [#allocation6], 2048
    $region29: #{tpu_custom_call.1} parent=1 // pred_fallthru
      _
    // Predicated region
    $region30: #{tpu_custom_call.1} parent=1 // pred_check
      _
    $region31: #{tpu_custom_call.1} parent=1 // pred_check_branch
      %61 = sbr.rel (0) target = $region33
    $region32: #{tpu_custom_call.1} parent=1 // pred_region
      %62 = dma.done [#allocation6], 2048
    $region33: #{tpu_custom_call.1} parent=1 // pred_fallthru
      _
    %v63 = vld [vmem:[#allocation2] sm:$0xff]
    %v64 = vld [vmem:[#allocation5] sm:$0xff]
    %v65 = vld [vmem:[#allocation5 + $0x8] sm:$0xff]
    %v66 = vld [vmem:[#allocation5 + $0x10] sm:$0xff]
    %v67 = vld [vmem:[#allocation5 + $0x18] sm:$0xff]
    %v68 = vld [vmem:[#allocation5 + $0x20] sm:$0xff]
    %v69 = vld [vmem:[#allocation5 + $0x28] sm:$0xff]
    %v70 = vld [vmem:[#allocation5 + $0x30] sm:$0xff]
    %v71 = vld [vmem:[#allocation5 + $0x38] sm:$0xff]
    %v72 = vld [vmem:[#allocation5 + $0x40] sm:$0xff]
    %v73 = vld [vmem:[#allocation5 + $0x48] sm:$0xff]
    %v74 = vld [vmem:[#allocation5 + $0x50] sm:$0xff]
    %v75 = vld [vmem:[#allocation5 + $0x58] sm:$0xff]
    %v76 = vld [vmem:[#allocation5 + $0x60] sm:$0xff]
    %v77 = vld [vmem:[#allocation5 + $0x68] sm:$0xff]
    %v78 = vld [vmem:[#allocation5 + $0x70] sm:$0xff]
    %v79 = vld [vmem:[#allocation5 + $0x78] sm:$0xff]
    %v80 = vld [vmem:[%s2] sm:$0x1]
    %v82 = vlaneseq
    %v83 = vshrl.u32 %v82, 7
    %v84 = vsub.s32 0, %v83
    %v85 = vrot.slane %v80, %v84
    %87 = vmatprep.subr.mxu0 0.0
    %88 = vmatpush1.msra.mxu0 %v64
    %89 = vmatprep.subr.mxu0 0.0
    %90 = vmatpush1.msra.mxu0 %v65
    %91 = vmatprep.subr.mxu0 0.0
    %92 = vmatpush1.msra.mxu0 %v66
    %93 = vmatprep.subr.mxu0 0.0
    %94 = vmatpush1.msra.mxu0 %v67
    %95 = vmatprep.subr.mxu0 0.0
    %96 = vmatpush1.msra.mxu0 %v68
    %97 = vmatprep.subr.mxu0 0.0
    %98 = vmatpush1.msra.mxu0 %v69
    %99 = vmatprep.subr.mxu0 0.0
    %100 = vmatpush1.msra.mxu0 %v70
    %101 = vmatprep.subr.mxu0 0.0
    %102 = vmatpush1.msra.mxu0 %v71
    %103 = vmatprep.subr.mxu0 0.0
    %104 = vmatpush1.msra.mxu0 %v72
    %105 = vmatprep.subr.mxu0 0.0
    %106 = vmatpush1.msra.mxu0 %v73
    %107 = vmatprep.subr.mxu0 0.0
    %108 = vmatpush1.msra.mxu0 %v74
    %109 = vmatprep.subr.mxu0 0.0
    %110 = vmatpush1.msra.mxu0 %v75
    %111 = vmatprep.subr.mxu0 0.0
    %112 = vmatpush1.msra.mxu0 %v76
    %113 = vmatprep.subr.mxu0 0.0
    %114 = vmatpush1.msra.mxu0 %v77
    %115 = vmatprep.subr.mxu0 0.0
    %116 = vmatpush1.msra.mxu0 %v78
    %117 = vmatprep.subr.mxu0 0.0
    %118 = vmatpush1.msra.mxu0 %v79
    %119 = vmatprep.subr.mxu0 0.0
    %120 = vmatpush1.msra.mxu0 0.0
    %121 = vmatprep.subr.mxu0 0.0
    %122 = vmatpush1.msra.mxu0 0.0
    %123 = vmatprep.subr.mxu0 0.0
    %124 = vmatpush1.msra.mxu0 0.0
    %125 = vmatprep.subr.mxu0 0.0
    %126 = vmatpush1.msra.mxu0 0.0
    %127 = vmatprep.subr.mxu0 0.0
    %128 = vmatpush1.msra.mxu0 0.0
    %129 = vmatprep.subr.mxu0 0.0
    %130 = vmatpush1.msra.mxu0 0.0
    %131 = vmatprep.subr.mxu0 0.0
    %132 = vmatpush1.msra.mxu0 0.0
    %133 = vmatprep.subr.mxu0 0.0
    %134 = vmatpush1.msra.mxu0 0.0
    %135 = vmatprep.subr.mxu0 0.0
    %136 = vmatpush1.msra.mxu0 0.0
    %137 = vmatprep.subr.mxu0 0.0
    %138 = vmatpush1.msra.mxu0 0.0
    %139 = vmatprep.subr.mxu0 0.0
    %140 = vmatpush1.msra.mxu0 0.0
    %141 = vmatprep.subr.mxu0 0.0
    %142 = vmatpush1.msra.mxu0 0.0
    %143 = vmatprep.subr.mxu0 0.0
    %144 = vmatpush1.msra.mxu0 0.0
    %145 = vmatprep.subr.mxu0 0.0
    %146 = vmatpush1.msra.mxu0 0.0
    %147 = vmatprep.subr.mxu0 0.0
    %148 = vmatpush1.msra.mxu0 0.0
    %149 = vmatprep.subr.mxu0 0.0
    %150 = vmatpush1.msra.mxu0 0.0
    %151 = vmatprep.mubr.f32.mxu0 0.0
    %152 = vmatmul.mubr.f32.gmra.mrb[0].mxu0 %v63
    %v153 = vpop.f32.mrb[0].mxu0
    %v154 = vadd.f32 %v85, %v153
    %v155 = vpop.f32.mrb[0].mxu0
    %156 = vdwg.mxu0
    %v157 = vmax.f32 %v154, 0.0
    %158 = vst [vmem:[#allocation8] sm:$0xff] %v157
    %v159 = vld [vmem:[#allocation7] sm:$0xff]
    %v160 = vld [vmem:[#allocation7 + $0x8] sm:$0xff]
    %v161 = vld [vmem:[#allocation7 + $0x10] sm:$0xff]
    %v162 = vld [vmem:[#allocation7 + $0x18] sm:$0xff]
    %v163 = vld [vmem:[#allocation7 + $0x20] sm:$0xff]
    %v164 = vld [vmem:[#allocation7 + $0x28] sm:$0xff]
    %v165 = vld [vmem:[#allocation7 + $0x30] sm:$0xff]
    %v166 = vld [vmem:[#allocation7 + $0x38] sm:$0xff]
    %v167 = vld [vmem:[#allocation7 + $0x40] sm:$0xff]
    %v168 = vld [vmem:[#allocation7 + $0x48] sm:$0xff]
    %v169 = vld [vmem:[#allocation7 + $0x50] sm:$0xff]
    %v170 = vld [vmem:[#allocation7 + $0x58] sm:$0xff]
    %v171 = vld [vmem:[#allocation7 + $0x60] sm:$0xff]
    %v172 = vld [vmem:[#allocation7 + $0x68] sm:$0xff]
    %v173 = vld [vmem:[#allocation7 + $0x70] sm:$0xff]
    %v174 = vld [vmem:[#allocation7 + $0x78] sm:$0xff]
    %v175 = vld [vmem:[%s4] sm:$0x1]
    %v177 = vlaneseq
    %v178 = vshrl.u32 %v177, 7
    %v179 = vsub.s32 0, %v178
    %v180 = vrot.slane %v175, %v179
    %182 = vmatprep.subr.mxu0 0.0
    %183 = vmatpush1.msra.mxu0 %v159
    %184 = vmatprep.subr.mxu0 0.0
    %185 = vmatpush1.msra.mxu0 %v160
    %186 = vmatprep.subr.mxu0 0.0
    %187 = vmatpush1.msra.mxu0 %v161
    %188 = vmatprep.subr.mxu0 0.0
    %189 = vmatpush1.msra.mxu0 %v162
    %190 = vmatprep.subr.mxu0 0.0
    %191 = vmatpush1.msra.mxu0 %v163
    %192 = vmatprep.subr.mxu0 0.0
    %193 = vmatpush1.msra.mxu0 %v164
    %194 = vmatprep.subr.mxu0 0.0
    %195 = vmatpush1.msra.mxu0 %v165
    %196 = vmatprep.subr.mxu0 0.0
    %197 = vmatpush1.msra.mxu0 %v166
    %198 = vmatprep.subr.mxu0 0.0
    %199 = vmatpush1.msra.mxu0 %v167
    %200 = vmatprep.subr.mxu0 0.0
    %201 = vmatpush1.msra.mxu0 %v168
    %202 = vmatprep.subr.mxu0 0.0
    %203 = vmatpush1.msra.mxu0 %v169
    %204 = vmatprep.subr.mxu0 0.0
    %205 = vmatpush1.msra.mxu0 %v170
    %206 = vmatprep.subr.mxu0 0.0
    %207 = vmatpush1.msra.mxu0 %v171
    %208 = vmatprep.subr.mxu0 0.0
    %209 = vmatpush1.msra.mxu0 %v172
    %210 = vmatprep.subr.mxu0 0.0
    %211 = vmatpush1.msra.mxu0 %v173
    %212 = vmatprep.subr.mxu0 0.0
    %213 = vmatpush1.msra.mxu0 %v174
    %214 = vmatprep.subr.mxu0 0.0
    %215 = vmatpush1.msra.mxu0 0.0
    %216 = vmatprep.subr.mxu0 0.0
    %217 = vmatpush1.msra.mxu0 0.0
    %218 = vmatprep.subr.mxu0 0.0
    %219 = vmatpush1.msra.mxu0 0.0
    %220 = vmatprep.subr.mxu0 0.0
    %221 = vmatpush1.msra.mxu0 0.0
    %222 = vmatprep.subr.mxu0 0.0
    %223 = vmatpush1.msra.mxu0 0.0
    %224 = vmatprep.subr.mxu0 0.0
    %225 = vmatpush1.msra.mxu0 0.0
    %226 = vmatprep.subr.mxu0 0.0
    %227 = vmatpush1.msra.mxu0 0.0
    %228 = vmatprep.subr.mxu0 0.0
    %229 = vmatpush1.msra.mxu0 0.0
    %230 = vmatprep.subr.mxu0 0.0
    %231 = vmatpush1.msra.mxu0 0.0
    %232 = vmatprep.subr.mxu0 0.0
    %233 = vmatpush1.msra.mxu0 0.0
    %234 = vmatprep.subr.mxu0 0.0
    %235 = vmatpush1.msra.mxu0 0.0
    %236 = vmatprep.subr.mxu0 0.0
    %237 = vmatpush1.msra.mxu0 0.0
    %238 = vmatprep.subr.mxu0 0.0
    %239 = vmatpush1.msra.mxu0 0.0
    %240 = vmatprep.subr.mxu0 0.0
    %241 = vmatpush1.msra.mxu0 0.0
    %242 = vmatprep.subr.mxu0 0.0
    %243 = vmatpush1.msra.mxu0 0.0
    %244 = vmatprep.subr.mxu0 0.0
    %245 = vmatpush1.msra.mxu0 0.0
    %246 = vmatprep.mubr.f32.mxu0 0.0
    %247 = vmatmul.mubr.f32.gmra.mrb[0].mxu0 %v157
    %v248 = vpop.f32.mrb[0].mxu0
    %v249 = vadd.f32 %v180, %v248
    %v250 = vpop.f32.mrb[0].mxu0
    %251 = vdwg.mxu0
    %252 = vmax.xlane.f32.xlu0 %v249
    %v253 = vpop.xlane.xlu0 %252
    %v254 = vsub.f32 %v249, %v253
    %v255 = vmul.f32 %v254, 1.442695
    %v256 = vpow.pop %v255
    %257 = vadd.xlane.f32.xlu0 %v256
    %v258 = vpop.xlane.xlu0 %257
    %v259 = vlog2.pop %v258
    %v260 = vmul.f32 %v259, 0.6931472
    %v261 = vsub.f32 %v254, %v260
    %262 = vst [vmem:[#allocation9] sm:$0xff] %v261
    // Predicated region
    $region34: #{tpu_custom_call.1} parent=1 // pred_check
      _
    $region35: #{tpu_custom_call.1} parent=1 // pred_check_branch
      %264 = sbr.rel (0) target = $region37
    $region36: #{tpu_custom_call.1} parent=1 // pred_region
      %s266 = ssub.s32 128, 128
      %267 = vsyncadd [#allocation4], %s266
      %s269 = sshll.u32 [#allocation8], 4
      %s270 = int_to_ptr.vmem [resolvable:$true] %s269
      %272 = dma.vmem_to_hbm [thread:$0]  %s270, 128, %s5, [#allocation4]
    $region37: #{tpu_custom_call.1} parent=1 // pred_fallthru
      _
    // Predicated region
    $region38: #{tpu_custom_call.1} parent=1 // pred_check
      _
    $region39: #{tpu_custom_call.1} parent=1 // pred_check_branch
      %274 = sbr.rel (0) target = $region41
    $region40: #{tpu_custom_call.1} parent=1 // pred_region
      %s276 = ssub.s32 128, 128
      %277 = vsyncadd [#allocation10], %s276
      %s279 = sshll.u32 [#allocation9], 4
      %s280 = int_to_ptr.vmem [resolvable:$true] %s279
      %282 = dma.vmem_to_hbm [thread:$0]  %s280, 128, %s6, [#allocation10]
    $region41: #{tpu_custom_call.1} parent=1 // pred_fallthru
      _
    // Predicated region
    $region42: #{tpu_custom_call.1} parent=1 // pred_check
      _
    $region43: #{tpu_custom_call.1} parent=1 // pred_check_branch
      %284 = sbr.rel (0) target = $region45
    $region44: #{tpu_custom_call.1} parent=1 // pred_region
      %285 = dma.done [#allocation4], 128
    $region45: #{tpu_custom_call.1} parent=1 // pred_fallthru
      _
    // Predicated region
    $region46: #{tpu_custom_call.1} parent=1 // pred_check
      _
    $region47: #{tpu_custom_call.1} parent=1 // pred_check_branch
      %287 = sbr.rel (0) target = $region49
    $region48: #{tpu_custom_call.1} parent=1 // pred_region
      %288 = dma.done [#allocation10], 128
    $region49: #{tpu_custom_call.1} parent=1 // pred_fallthru
      _
    %289 = vsyncpa [#allocation3], 1
    %290 = vsyncpa [#allocation6], 1
    %291 = vsyncpa [#allocation4], 1
    %292 = vsyncpa [#allocation10], 1

</llo_original>
